<compile_context>
chip_gen: v7x
topology: tpu7x:2x2x1
jax: 0.10.0
libtpu: 0.0.40
codegen_flags: <defaults>
</compile_context>

<pallas_src>
import functools
import math

import jax
import jax.numpy as jnp
from jax import lax
from jax.experimental import pallas as pl
from jax.experimental.pallas import tpu as pltpu


# ---------------------------------------------------------------------------
# stage 1: Yt = x^T @ V (reduction over node tiles), then
#          Mt = 2 * sum_j Wsig_j^T @ (diag_j ⊙ Y)              -> [out, k]
# ---------------------------------------------------------------------------
def _project_kernel(v_ref, x_ref, diag_ref, wsig_ref, mt_ref, yt_acc, *, d):
    i = pl.program_id(0)

    @pl.when(i == 0)
    def _():
        yt_acc[...] = jnp.zeros_like(yt_acc)

    # Yt += x_tile^T @ V_tile : the big operand (V) contracts its *leading*
    # axis (canonical rhs), so the [tn, k] tile never needs an in-kernel
    # relayout; only the tiny x tile sits on the transposed-lhs side.
    # Accumulating as [c, k] keeps k on lanes (dense vregs, small scratch).
    yt_acc[...] += lax.dot_general(
        x_ref[...], v_ref[...],
        dimension_numbers=(((0,), (0,)), ((), ())),
        preferred_element_type=jnp.float32)

    @pl.when(i == pl.num_programs(0) - 1)
    def _():
        yt = yt_acc[...]                                   # [c, k] == (V^T x)^T
        # Mt[o, k] = 2 * sum_j sum_c Wsig[j, c, o] * diag[j, k] * Y[k, c]
        acc = lax.dot_general(
            wsig_ref[0], yt * diag_ref[0],
            dimension_numbers=(((0,), (0,)), ((), ())),
            preferred_element_type=jnp.float32)            # [out, k]
        for j in range(1, d):                              # d small & static
            acc = acc + lax.dot_general(
                wsig_ref[j], yt * diag_ref[j],
                dimension_numbers=(((0,), (0,)), ((), ())),
                preferred_element_type=jnp.float32)
        mt_ref[...] = 2.0 * acc                            # fold the "2*" here


# ---------------------------------------------------------------------------
# stage 2: per node-row tile,  out[tile, :] = x @ Wx + V @ M + b
# (w_j*I @ x folded into Wx = sum_j w_j*Wsig_j -> no eye, no dense filter;
#  bias folded into the single store; both matmuls canonical/rhs-transposed)
# ---------------------------------------------------------------------------
def _apply_kernel(v_ref, x_ref, mt_ref, wx_ref, b_ref, o_ref):
    xw = jnp.dot(x_ref[...], wx_ref[...],                  # [tn, out]
                 preferred_element_type=jnp.float32)
    vm = lax.dot_general(                                  # V @ M == V @ Mt^T
        v_ref[...], mt_ref[...],
        dimension_numbers=(((1,), (1,)), ((), ())),
        preferred_element_type=jnp.float32)                # [tn, out]
    o_ref[...] = xw + vm + b_ref[...]


def cayley_conv_pallas(eig_vecs, diag_real, w_real, x, w_sig_t, bias):
    """eig_vecs [n,k] f32, diag_real [d,k] f32, w_real [d] f32, x [n,c] f32,
    w_sig_t [d,c,out] f32, bias [out] f32  ->  [n, out] f32."""
    n, k = eig_vecs.shape
    d, c, out_ch = w_sig_t.shape

    # Pad the node axis to a multiple of 128 so row tiles satisfy the (8,128)
    # block rule.  Zero rows are inert for both stages and are sliced off.
    npad = -(-n // 128) * 128
    if npad != n:
        eig_vecs = jnp.pad(eig_vecs, ((0, npad - n), (0, 0)))
        x = jnp.pad(x, ((0, npad - n), (0, 0)))

    # Largest node tile that divides npad and keeps the double-buffered V/x
    # tiles comfortably inside the scoped-VMEM default (2x headroom).
    tn = 128
    for cand in (1024, 512, 256):
        if npad % cand == 0 and 16 * cand * (k + c) <= (16 << 20):
            tn = cand
            break
    n_tiles = npad // tn

    diag3 = diag_real.reshape(d, 1, k)                     # row-broadcast form

    mt = pl.pallas_call(
        functools.partial(_project_kernel, d=d),
        out_shape=jax.ShapeDtypeStruct((out_ch, k), jnp.float32),
        grid_spec=pltpu.PrefetchScalarGridSpec(
            num_scalar_prefetch=0,
            grid=(n_tiles,),
            in_specs=[
                pl.BlockSpec((tn, k), lambda i: (i, 0)),            # V rows
                pl.BlockSpec((tn, c), lambda i: (i, 0)),            # x rows
                pl.BlockSpec((d, 1, k), lambda i: (0, 0, 0)),       # Re(diag_j)
                pl.BlockSpec((d, c, out_ch), lambda i: (0, 0, 0)),  # Wsig_j
            ],
            out_specs=pl.BlockSpec((out_ch, k), lambda i: (0, 0)),
            scratch_shapes=[pltpu.VMEM((c, k), jnp.float32)],
        ),
        compiler_params=pltpu.CompilerParams(
            dimension_semantics=("arbitrary",)),           # node-tile reduction
    )(eig_vecs, x, diag3, w_sig_t)

    # Parameter-only fold of the identity term:
    # (w_j * I) @ x @ Wsig_j == x @ (w_j * Wsig_j)
    wx = jnp.einsum("j,jco->co", w_real, w_sig_t)          # [c, out]
    b2 = bias.reshape(1, out_ch)

    out = pl.pallas_call(
        _apply_kernel,
        out_shape=jax.ShapeDtypeStruct((npad, out_ch), jnp.float32),
        grid_spec=pltpu.PrefetchScalarGridSpec(
            num_scalar_prefetch=0,
            grid=(n_tiles,),
            in_specs=[
                pl.BlockSpec((tn, k), lambda i: (i, 0)),            # V rows
                pl.BlockSpec((tn, c), lambda i: (i, 0)),            # x rows
                pl.BlockSpec((out_ch, k), lambda i: (0, 0)),        # Mt
                pl.BlockSpec((c, out_ch), lambda i: (0, 0)),        # Wx
                pl.BlockSpec((1, out_ch), lambda i: (0, 0)),        # bias
            ],
            out_specs=pl.BlockSpec((tn, out_ch), lambda i: (i, 0)),
        ),
        compiler_params=pltpu.CompilerParams(
            dimension_semantics=("parallel",)),            # independent tiles
    )(eig_vecs, x, mt, wx, b2)

    return out[:n]


def init_params(key, r, d, in_channels, out_channels):
    """Deterministic synthetic parameters matching the module's shapes."""
    ks = jax.random.split(key, 5)
    h = jnp.float32(0.5)
    alpha = jnp.float32(0.1)
    # real_linear: Linear(1, d, bias=False) -> weight [d, 1]
    real_w = jax.random.uniform(ks[0], (d, 1), jnp.float32, -1.0, 1.0)
    # complex_linear: ComplexLinear(r, d, bias=False) -> weight [d, r] complex
    bc = 1.0 / math.sqrt(r)
    cw_real = jax.random.uniform(ks[1], (d, r), jnp.float32, -bc, bc)
    cw_imag = jax.random.uniform(ks[2], (d, r), jnp.float32, -bc, bc)
    complex_w = cw_real + 1j * cw_imag
    # signal_linear: Linear(in_channels*d, out_channels, bias=True)
    fan_in = in_channels * d
    bs = 1.0 / math.sqrt(fan_in)
    sig_w = jax.random.uniform(ks[3], (out_channels, fan_in), jnp.float32, -bs, bs)
    sig_b = jax.random.uniform(ks[4], (out_channels,), jnp.float32, -bs, bs)
    return dict(h=h, alpha=alpha, real_w=real_w, complex_w=complex_w,
                sig_w=sig_w, sig_b=sig_b)


def _graph_spectral_setup(params, x, edge_index, r, d, eig_ratio):
    """Laplacian, eigenpairs and the per-filter real diagonals (plain-JAX glue)."""
    n_nodes = x.shape[0]
    k = max(int(n_nodes * eig_ratio), 6)

    row, col = edge_index[0], edge_index[1]
    edge_weight = jnp.ones((edge_index.shape[1],), jnp.float32)

    # get_laplacian(normalization=None): L = D - A
    deg = jnp.zeros((n_nodes,), jnp.float32).at[row].add(edge_weight)
    lap = jnp.zeros((n_nodes, n_nodes), jnp.float32).at[row, col].add(-edge_weight)
    lap = lap + jnp.diag(deg)

    # TODO(synk): scipy.sparse.linalg.eigsh (Lanczos) has no Pallas equivalent;
    # use dense jnp.linalg.eigh and keep the k largest eigenpairs (Laplacian is
    # PSD so largest-algebraic == eigsh's default largest-magnitude).
    vals_all, vecs_all = jnp.linalg.eigh(lap)
    eig_vals = vals_all[-k:]
    eig_vecs = vecs_all[:, -k:].astype(jnp.float32)

    # eigen Cayley filter (identically 1+0j, computed exactly as the reference)
    num = params["h"] * eig_vals - params["alpha"] * 1j
    eigen_filter = num / num                                        # [k] complex

    poly = jnp.stack([eigen_filter ** j for j in range(1, 1 + r)])  # [r, k]
    d_filters = poly.T @ params["complex_w"].T                      # [k, d] complex
    # torch.sparse_coo_tensor pairing: values = d_filters.view(-1), indices (j,i,i)
    # -> filter j's diagonal is flat[j*k : (j+1)*k]   (kept bit-for-bit as in
    # the original module, even though it interleaves rather than transposes).
    diag_real = jnp.real(d_filters.reshape(-1)).reshape(d, k).astype(jnp.float32)

    w_real = params["real_w"][:, 0]                                 # [d]
    return eig_vecs, diag_real, w_real


def cayley_conv_lanczos_forward(params, x, edge_index, r, d, eig_ratio=0.2):
    eig_vecs, diag_real, w_real = _graph_spectral_setup(
        params, x, edge_index, r, d, eig_ratio)
    out_ch = params["sig_w"].shape[0]
    c = x.shape[1]
    # feature index in transformed_x is j*c + c_idx -> per-filter [d, c, out]
    w_sig_t = jnp.transpose(params["sig_w"].reshape(out_ch, d, c), (1, 2, 0))
    return cayley_conv_pallas(eig_vecs, diag_real, w_real,
                              x.astype(jnp.float32), w_sig_t, params["sig_b"])


def _reference(eig_vecs, diag_real, w_real, x, sig_w, sig_b, d):
    """Plain-JAX check mirroring the PyTorch compute path (dense filters)."""
    n = x.shape[0]
    filt = jnp.stack([
        w_real[j] * jnp.eye(n, dtype=jnp.float32)
        + 2.0 * (eig_vecs * diag_real[j]) @ eig_vecs.T
        for j in range(d)
    ])                                                   # [d, n, n]
    t = jnp.einsum("dnm,mc->dnc", filt, x)               # [d, n, c]
    tx = jnp.transpose(t, (1, 0, 2)).reshape(n, -1)      # [n, d*c]
    return tx @ sig_w.T + sig_b


if __name__ == "__main__":
    key = jax.random.PRNGKey(0)
    k_param, k_x = jax.random.split(key)

    n_nodes, in_channels, out_channels, r, d = 16, 4, 8, 3, 4
    params = init_params(k_param, r, d, in_channels, out_channels)
    x = jax.random.normal(k_x, (n_nodes, in_channels), jnp.float32)

    # deterministic ring graph (undirected -> both directions)
    src = jnp.arange(n_nodes, dtype=jnp.int32)
    dst = (src + 1) % n_nodes
    edge_index = jnp.stack([jnp.concatenate([src, dst]),
                            jnp.concatenate([dst, src])])

    out = cayley_conv_lanczos_forward(params, x, edge_index, r, d)
    out = jax.block_until_ready(out)
    assert out.shape == (n_nodes, out_channels)

    # correctness check against a plain-JAX dense reference of the same math
    eig_vecs, diag_real, w_real = _graph_spectral_setup(
        params, x, edge_index, r, d, 0.2)
    ref = _reference(eig_vecs, diag_real, w_real, x,
                     params["sig_w"], params["sig_b"], d)
    err = float(jnp.max(jnp.abs(out - ref)))
    assert jnp.allclose(out, ref, rtol=5e-4, atol=5e-4), err

    print("KERNEL_OK")
</pallas_src>

<mosaic_0001>
module attributes {stable_mosaic.version = 11 : i64} {
  func.func @_project_kernel(%arg0: i32, %arg1: memref<128x6xf32, #tpu.memory_space<vmem>>, %arg2: memref<128x4xf32, #tpu.memory_space<vmem>>, %arg3: memref<4x1x6xf32, #tpu.memory_space<vmem>>, %arg4: memref<4x4x8xf32, #tpu.memory_space<vmem>>, %arg5: memref<8x6xf32, #tpu.memory_space<vmem>>, %arg6: memref<4x6xf32, #tpu.memory_space<vmem>>) attributes {dimension_semantics = [#tpu.dimension_semantics<arbitrary>], iteration_bounds = array<i64: 1>, scalar_prefetch = 0 : i64, scratch_operands = 1 : i64, tpu.core_type = #tpu.core_type<tc>, window_params = [{transform_indices = @transform_0, window_bounds = array<i64: 128, 6>}, {transform_indices = @transform_1, window_bounds = array<i64: 128, 4>}, {pipeline_mode = #tpu.pipeline_mode<synchronous>, transform_indices = @transform_2, window_bounds = array<i64: 4, 1, 6>}, {pipeline_mode = #tpu.pipeline_mode<synchronous>, transform_indices = @transform_3, window_bounds = array<i64: 4, 4, 8>}, {pipeline_mode = #tpu.pipeline_mode<synchronous>, transform_indices = @transform_4, window_bounds = array<i64: 8, 6>}]} {
    %c0_i32 = arith.constant 0 : i32
    %0 = arith.cmpi eq, %arg0, %c0_i32 : i32
    %1 = arith.extui %0 : i1 to i32
    %c0_i32_0 = arith.constant 0 : i32
    %2 = arith.cmpi ne, %1, %c0_i32_0 : i32
    scf.if %2 {
      %cst_10 = arith.constant 0.000000e+00 : f32
      %12 = vector.broadcast %cst_10 : f32 to vector<4x6xf32>
      %c0_11 = arith.constant 0 : index
      %c0_12 = arith.constant 0 : index
      %13 = vector.load %arg6[%c0_11, %c0_12] : memref<4x6xf32, #tpu.memory_space<vmem>>, vector<4x6xf32>
      tpu.vector_store %arg6[%c0_11, %c0_12], %12 {strides = array<i32>} : memref<4x6xf32, #tpu.memory_space<vmem>>, vector<4x6xf32>,
    } else {
    }
    %c0 = arith.constant 0 : index
    %c0_1 = arith.constant 0 : index
    %3 = vector.load %arg6[%c0, %c0_1] : memref<4x6xf32, #tpu.memory_space<vmem>>, vector<4x6xf32>
    %c0_2 = arith.constant 0 : index
    %c0_3 = arith.constant 0 : index
    %4 = vector.load %arg2[%c0_2, %c0_3] : memref<128x4xf32, #tpu.memory_space<vmem>>, vector<128x4xf32>
    %c0_4 = arith.constant 0 : index
    %c0_5 = arith.constant 0 : index
    %5 = vector.load %arg1[%c0_4, %c0_5] : memref<128x6xf32, #tpu.memory_space<vmem>>, vector<128x6xf32>
    %cst = arith.constant dense<0.000000e+00> : vector<4x6xf32>
    %6 = tpu.matmul %4, %5, %cst {dimension_numbers = #tpu.dot_dimension_numbers<[0], [0], [1], [1], [0, 1, 1, 1], [], []>} : vector<128x4xf32>, vector<128x6xf32>, vector<4x6xf32> -> vector<4x6xf32>
    %7 = arith.addf %3, %6 : vector<4x6xf32>
    %c0_6 = arith.constant 0 : index
    %c0_7 = arith.constant 0 : index
    %8 = vector.load %arg6[%c0_6, %c0_7] : memref<4x6xf32, #tpu.memory_space<vmem>>, vector<4x6xf32>
    tpu.vector_store %arg6[%c0_6, %c0_7], %7 {strides = array<i32>} : memref<4x6xf32, #tpu.memory_space<vmem>>, vector<4x6xf32>,
    %c0_i32_8 = arith.constant 0 : i32
    %9 = arith.cmpi eq, %arg0, %c0_i32_8 : i32
    %10 = arith.extui %9 : i1 to i32
    %c0_i32_9 = arith.constant 0 : i32
    %11 = arith.cmpi ne, %10, %c0_i32_9 : i32
    scf.if %11 {
      %c0_10 = arith.constant 0 : index
      %c0_11 = arith.constant 0 : index
      %12 = vector.load %arg6[%c0_10, %c0_11] : memref<4x6xf32, #tpu.memory_space<vmem>>, vector<4x6xf32>
      %c0_12 = arith.constant 0 : index
      %c0_13 = arith.constant 0 : index
      %c0_14 = arith.constant 0 : index
      %13 = vector.load %arg4[%c0_12, %c0_13, %c0_14] : memref<4x4x8xf32, #tpu.memory_space<vmem>>, vector<1x4x8xf32>
      %14 = vector.shape_cast %13 : vector<1x4x8xf32> to vector<4x8xf32>
      %c0_15 = arith.constant 0 : index
      %c0_16 = arith.constant 0 : index
      %c0_17 = arith.constant 0 : index
      %15 = vector.load %arg3[%c0_15, %c0_16, %c0_17] : memref<4x1x6xf32, #tpu.memory_space<vmem>>, vector<1x1x6xf32>
      %16 = vector.shape_cast %15 : vector<1x1x6xf32> to vector<1x6xf32>
      %17 = vector.broadcast %16 : vector<1x6xf32> to vector<4x6xf32>
      %18 = arith.mulf %12, %17 : vector<4x6xf32>
      %cst_18 = arith.constant dense<0.000000e+00> : vector<8x6xf32>
      %19 = tpu.matmul %14, %18, %cst_18 {dimension_numbers = #tpu.dot_dimension_numbers<[0], [0], [1], [1], [0, 1, 1, 1], [], []>} : vector<4x8xf32>, vector<4x6xf32>, vector<8x6xf32> -> vector<8x6xf32>
      %c1 = arith.constant 1 : index
      %c0_19 = arith.constant 0 : index
      %c0_20 = arith.constant 0 : index
      %20 = vector.load %arg4[%c1, %c0_19, %c0_20] : memref<4x4x8xf32, #tpu.memory_space<vmem>>, vector<1x4x8xf32>
      %21 = vector.shape_cast %20 : vector<1x4x8xf32> to vector<4x8xf32>
      %c1_21 = arith.constant 1 : index
      %c0_22 = arith.constant 0 : index
      %c0_23 = arith.constant 0 : index
      %22 = vector.load %arg3[%c1_21, %c0_22, %c0_23] : memref<4x1x6xf32, #tpu.memory_space<vmem>>, vector<1x1x6xf32>
      %23 = vector.shape_cast %22 : vector<1x1x6xf32> to vector<1x6xf32>
      %24 = vector.broadcast %23 : vector<1x6xf32> to vector<4x6xf32>
      %25 = arith.mulf %12, %24 : vector<4x6xf32>
      %cst_24 = arith.constant dense<0.000000e+00> : vector<8x6xf32>
      %26 = tpu.matmul %21, %25, %cst_24 {dimension_numbers = #tpu.dot_dimension_numbers<[0], [0], [1], [1], [0, 1, 1, 1], [], []>} : vector<4x8xf32>, vector<4x6xf32>, vector<8x6xf32> -> vector<8x6xf32>
      %27 = arith.addf %19, %26 : vector<8x6xf32>
      %c2 = arith.constant 2 : index
      %c0_25 = arith.constant 0 : index
      %c0_26 = arith.constant 0 : index
      %28 = vector.load %arg4[%c2, %c0_25, %c0_26] : memref<4x4x8xf32, #tpu.memory_space<vmem>>, vector<1x4x8xf32>
      %29 = vector.shape_cast %28 : vector<1x4x8xf32> to vector<4x8xf32>
      %c2_27 = arith.constant 2 : index
      %c0_28 = arith.constant 0 : index
      %c0_29 = arith.constant 0 : index
      %30 = vector.load %arg3[%c2_27, %c0_28, %c0_29] : memref<4x1x6xf32, #tpu.memory_space<vmem>>, vector<1x1x6xf32>
      %31 = vector.shape_cast %30 : vector<1x1x6xf32> to vector<1x6xf32>
      %32 = vector.broadcast %31 : vector<1x6xf32> to vector<4x6xf32>
      %33 = arith.mulf %12, %32 : vector<4x6xf32>
      %cst_30 = arith.constant dense<0.000000e+00> : vector<8x6xf32>
      %34 = tpu.matmul %29, %33, %cst_30 {dimension_numbers = #tpu.dot_dimension_numbers<[0], [0], [1], [1], [0, 1, 1, 1], [], []>} : vector<4x8xf32>, vector<4x6xf32>, vector<8x6xf32> -> vector<8x6xf32>
      %35 = arith.addf %27, %34 : vector<8x6xf32>
      %c3 = arith.constant 3 : index
      %c0_31 = arith.constant 0 : index
      %c0_32 = arith.constant 0 : index
      %36 = vector.load %arg4[%c3, %c0_31, %c0_32] : memref<4x4x8xf32, #tpu.memory_space<vmem>>, vector<1x4x8xf32>
      %37 = vector.shape_cast %36 : vector<1x4x8xf32> to vector<4x8xf32>
      %c3_33 = arith.constant 3 : index
      %c0_34 = arith.constant 0 : index
      %c0_35 = arith.constant 0 : index
      %38 = vector.load %arg3[%c3_33, %c0_34, %c0_35] : memref<4x1x6xf32, #tpu.memory_space<vmem>>, vector<1x1x6xf32>
      %39 = vector.shape_cast %38 : vector<1x1x6xf32> to vector<1x6xf32>
      %40 = vector.broadcast %39 : vector<1x6xf32> to vector<4x6xf32>
      %41 = arith.mulf %12, %40 : vector<4x6xf32>
      %cst_36 = arith.constant dense<0.000000e+00> : vector<8x6xf32>
      %42 = tpu.matmul %37, %41, %cst_36 {dimension_numbers = #tpu.dot_dimension_numbers<[0], [0], [1], [1], [0, 1, 1, 1], [], []>} : vector<4x8xf32>, vector<4x6xf32>, vector<8x6xf32> -> vector<8x6xf32>
      %43 = arith.addf %35, %42 : vector<8x6xf32>
      %cst_37 = arith.constant 2.000000e+00 : f32
      %44 = vector.broadcast %cst_37 : f32 to vector<8x6xf32>
      %45 = arith.mulf %44, %43 : vector<8x6xf32>
      %c0_38 = arith.constant 0 : index
      %c0_39 = arith.constant 0 : index
      %46 = vector.load %arg5[%c0_38, %c0_39] : memref<8x6xf32, #tpu.memory_space<vmem>>, vector<8x6xf32>
      tpu.vector_store %arg5[%c0_38, %c0_39], %45 {strides = array<i32>} : memref<8x6xf32, #tpu.memory_space<vmem>>, vector<8x6xf32>,
    } else {
    }
    return
  }
  func.func @transform_0(%arg0: i32) -> (i32, i32) {
    %c0_i32 = arith.constant 0 : i32
    %c0_i32_0 = arith.constant 0 : i32
    return %arg0, %c0_i32 : i32, i32
  }
  func.func @transform_1(%arg0: i32) -> (i32, i32) {
    %c0_i32 = arith.constant 0 : i32
    %c0_i32_0 = arith.constant 0 : i32
    return %arg0, %c0_i32 : i32, i32
  }
  func.func @transform_2(%arg0: i32) -> (i32, i32, i32) {
    %c0_i32 = arith.constant 0 : i32
    %c0_i32_0 = arith.constant 0 : i32
    %c0_i32_1 = arith.constant 0 : i32
    %c0_i32_2 = arith.constant 0 : i32
    return %c0_i32, %c0_i32_0, %c0_i32_1 : i32, i32, i32
  }
  func.func @transform_3(%arg0: i32) -> (i32, i32, i32) {
    %c0_i32 = arith.constant 0 : i32
    %c0_i32_0 = arith.constant 0 : i32
    %c0_i32_1 = arith.constant 0 : i32
    %c0_i32_2 = arith.constant 0 : i32
    return %c0_i32, %c0_i32_0, %c0_i32_1 : i32, i32, i32
  }
  func.func @transform_4(%arg0: i32) -> (i32, i32) {
    %c0_i32 = arith.constant 0 : i32
    %c0_i32_0 = arith.constant 0 : i32
    %c0_i32_1 = arith.constant 0 : i32
    return %c0_i32, %c0_i32_0 : i32, i32
  }
}

</mosaic_0001>

<llo_original>
// kernel: tpu_custom_call.1
$region0: #{tpu_custom_call.1}
  #allocation0 [shape = 'u32[]', space=smem, size = 0x4, offset = 0x4, fixed_abs, tag = 'smem constant byte address 0x4 - core index']
  #allocation1 [shape = 'u32[144,128]{1,0:T(1,128)}', space=vmem, size = 0x12000, scoped, tag = 'internal scratch']
  #allocation2 [shape = 'f32[4,6]{1,0:T(4,128)}', space=vmem, size = 0x800, scoped, tag = 'scratch operand']
  %s0 = inlined_call_operand.vmem [shape: f32[128,6], index: 0, kind: input, shape index: {}]
  %s1 = inlined_call_operand.vmem [shape: f32[128,4], index: 1, kind: input, shape index: {}]
  %s2 = inlined_call_operand.vmem [shape: f32[4,1,6], index: 2, kind: input, shape index: {}]
  %s3 = inlined_call_operand.vmem [shape: f32[4,4,8], index: 3, kind: input, shape index: {}]
  %s4 = inlined_call_operand.hbm [shape: f32[8,6], index: 4, kind: output, shape index: {}]
  %s5 = sld [smem:[#allocation0]]
  $region34: #{tpu_custom_call.1} parent=0
    _
  %s7 = ssub.s32 1, %s5
  %s8 = scalar_select 0, %s7, %s5
  $region1: #{tpu_custom_call.1} parent=0
    #allocation3 [shape = 'u8[4096]{0}', space=vmem, size = 0x1000, scoped, tag = 'output window, operand 0, single buffered']
    #allocation4 [shape = 's32[1]{0}', space=sflag, size = 0x4, scoped, tag = 'scoped memory for tpu_custom_call.1']
    %9 = vsyncpa [#allocation4], 0
    // Predicated region
    $region2: #{tpu_custom_call.1} parent=1 // pred_check
      _
    $region3: #{tpu_custom_call.1} parent=1 // pred_check_branch
      %11 = sbr.rel (0) target = $region5
    $region4: #{tpu_custom_call.1} parent=1 // pred_region
      _
    $region5: #{tpu_custom_call.1} parent=1 // pred_fallthru
      _
    // Predicated region
    $region6: #{tpu_custom_call.1} parent=1 // pred_check
      _
    $region7: #{tpu_custom_call.1} parent=1 // pred_check_branch
      %13 = sbr.rel (0) target = $region9
    $region8: #{tpu_custom_call.1} parent=1 // pred_region
      _
    $region9: #{tpu_custom_call.1} parent=1 // pred_fallthru
      _
    // Predicated region
    $region10: #{tpu_custom_call.1} parent=1 // pred_check
      _
    $region11: #{tpu_custom_call.1} parent=1 // pred_check_branch
      %15 = sbr.rel (0) target = $region13
    $region12: #{tpu_custom_call.1} parent=1 // pred_region
      _
    $region13: #{tpu_custom_call.1} parent=1 // pred_fallthru
      _
    // Predicated region
    $region14: #{tpu_custom_call.1} parent=1 // pred_check
      _
    $region15: #{tpu_custom_call.1} parent=1 // pred_check_branch
      %17 = sbr.rel (0) target = $region17
    $region16: #{tpu_custom_call.1} parent=1 // pred_region
      _
    $region17: #{tpu_custom_call.1} parent=1 // pred_fallthru
      _
    %p18 = scmp.eq.s32.totalorder 0, 0
    // Predicated region
    $region18: #{tpu_custom_call.1} parent=1 // pred_check
      %p19 = pneg %p18
    $region19: #{tpu_custom_call.1} parent=1 // pred_check_branch
      %21 = sbr.rel (%p19) target = $region21
    $region20: #{tpu_custom_call.1} parent=1 // pred_region
      %vm22 = vcmask 44032
      %23 = vst.msk [vmem:[#allocation2] sm:$0xf] %vm22, 0.0
    $region21: #{tpu_custom_call.1} parent=1 // pred_fallthru
      _
    %v24 = vld [vmem:[#allocation2] sm:$0xf]
    %v25 = vld [vmem:[%s1] sm:$0xff]
    %v26 = vld [vmem:[%s1 + $0x8] sm:$0xff]
    %v27 = vld [vmem:[%s1 + $0x10] sm:$0xff]
    %v28 = vld [vmem:[%s1 + $0x18] sm:$0xff]
    %v29 = vld [vmem:[%s1 + $0x20] sm:$0xff]
    %v30 = vld [vmem:[%s1 + $0x28] sm:$0xff]
    %v31 = vld [vmem:[%s1 + $0x30] sm:$0xff]
    %v32 = vld [vmem:[%s1 + $0x38] sm:$0xff]
    %v33 = vld [vmem:[%s1 + $0x40] sm:$0xff]
    %v34 = vld [vmem:[%s1 + $0x48] sm:$0xff]
    %v35 = vld [vmem:[%s1 + $0x50] sm:$0xff]
    %v36 = vld [vmem:[%s1 + $0x58] sm:$0xff]
    %v37 = vld [vmem:[%s1 + $0x60] sm:$0xff]
    %v38 = vld [vmem:[%s1 + $0x68] sm:$0xff]
    %v39 = vld [vmem:[%s1 + $0x70] sm:$0xff]
    %v40 = vld [vmem:[%s1 + $0x78] sm:$0xff]
    %v41 = vld [vmem:[%s0] sm:$0xff]
    %v42 = vld [vmem:[%s0 + $0x8] sm:$0xff]
    %v43 = vld [vmem:[%s0 + $0x10] sm:$0xff]
    %v44 = vld [vmem:[%s0 + $0x18] sm:$0xff]
    %v45 = vld [vmem:[%s0 + $0x20] sm:$0xff]
    %v46 = vld [vmem:[%s0 + $0x28] sm:$0xff]
    %v47 = vld [vmem:[%s0 + $0x30] sm:$0xff]
    %v48 = vld [vmem:[%s0 + $0x38] sm:$0xff]
    %v49 = vld [vmem:[%s0 + $0x40] sm:$0xff]
    %v50 = vld [vmem:[%s0 + $0x48] sm:$0xff]
    %v51 = vld [vmem:[%s0 + $0x50] sm:$0xff]
    %v52 = vld [vmem:[%s0 + $0x58] sm:$0xff]
    %v53 = vld [vmem:[%s0 + $0x60] sm:$0xff]
    %v54 = vld [vmem:[%s0 + $0x68] sm:$0xff]
    %v55 = vld [vmem:[%s0 + $0x70] sm:$0xff]
    %v56 = vld [vmem:[%s0 + $0x78] sm:$0xff]
    %57 = vxpose.xlu0.b32.start [1/16] %v25, 128
    %58 = vxpose.xlu0.b32.cont [2/16] %v26, 128
    %59 = vxpose.xlu0.b32.cont [3/16] %v27, 128
    %60 = vxpose.xlu0.b32.cont [4/16] %v28, 128
    %61 = vxpose.xlu0.b32.cont [5/16] %v29, 128
    %62 = vxpose.xlu0.b32.cont [6/16] %v30, 128
    %63 = vxpose.xlu0.b32.cont [7/16] %v31, 128
    %64 = vxpose.xlu0.b32.cont [8/16] %v32, 128
    %65 = vxpose.xlu0.b32.cont [9/16] %v33, 128
    %66 = vxpose.xlu0.b32.cont [10/16] %v34, 128
    %67 = vxpose.xlu0.b32.cont [11/16] %v35, 128
    %68 = vxpose.xlu0.b32.cont [12/16] %v36, 128
    %69 = vxpose.xlu0.b32.cont [13/16] %v37, 128
    %70 = vxpose.xlu0.b32.cont [14/16] %v38, 128
    %71 = vxpose.xlu0.b32.cont [15/16] %v39, 128
    %72 = vxpose.xlu0.b32.end [16/16] %v40, 128
    %v73 = vpop.trf.xlu0
    %v74 = vpop.trf.xlu0
    %v75 = vpop.trf.xlu0
    %v76 = vpop.trf.xlu0
    %v77 = vpop.trf.xlu0
    %v78 = vpop.trf.xlu0
    %v79 = vpop.trf.xlu0
    %v80 = vpop.trf.xlu0
    %v81 = vpop.trf.xlu0
    %v82 = vpop.trf.xlu0
    %v83 = vpop.trf.xlu0
    %v84 = vpop.trf.xlu0
    %v85 = vpop.trf.xlu0
    %v86 = vpop.trf.xlu0
    %v87 = vpop.trf.xlu0
    %v88 = vpop.trf.xlu0
    %89 = vmatprep.subr.mxu0 0.0
    %90 = vmatpush1.msra.mxu0 %v41
    %91 = vmatprep.subr.mxu0 0.0
    %92 = vmatpush1.msra.mxu0 %v42
    %93 = vmatprep.subr.mxu0 0.0
    %94 = vmatpush1.msra.mxu0 %v43
    %95 = vmatprep.subr.mxu0 0.0
    %96 = vmatpush1.msra.mxu0 %v44
    %97 = vmatprep.subr.mxu0 0.0
    %98 = vmatpush1.msra.mxu0 %v45
    %99 = vmatprep.subr.mxu0 0.0
    %100 = vmatpush1.msra.mxu0 %v46
    %101 = vmatprep.subr.mxu0 0.0
    %102 = vmatpush1.msra.mxu0 %v47
    %103 = vmatprep.subr.mxu0 0.0
    %104 = vmatpush1.msra.mxu0 %v48
    %105 = vmatprep.subr.mxu0 0.0
    %106 = vmatpush1.msra.mxu0 %v49
    %107 = vmatprep.subr.mxu0 0.0
    %108 = vmatpush1.msra.mxu0 %v50
    %109 = vmatprep.subr.mxu0 0.0
    %110 = vmatpush1.msra.mxu0 %v51
    %111 = vmatprep.subr.mxu0 0.0
    %112 = vmatpush1.msra.mxu0 %v52
    %113 = vmatprep.subr.mxu0 0.0
    %114 = vmatpush1.msra.mxu0 %v53
    %115 = vmatprep.subr.mxu0 0.0
    %116 = vmatpush1.msra.mxu0 %v54
    %117 = vmatprep.subr.mxu0 0.0
    %118 = vmatpush1.msra.mxu0 %v55
    %119 = vmatprep.subr.mxu0 0.0
    %120 = vmatpush1.msra.mxu0 %v56
    %121 = vmatprep.subr.mxu0 0.0
    %122 = vmatpush1.msra.mxu0 0.0
    %123 = vmatprep.subr.mxu0 0.0
    %124 = vmatpush1.msra.mxu0 0.0
    %125 = vmatprep.subr.mxu0 0.0
    %126 = vmatpush1.msra.mxu0 0.0
    %127 = vmatprep.subr.mxu0 0.0
    %128 = vmatpush1.msra.mxu0 0.0
    %129 = vmatprep.subr.mxu0 0.0
    %130 = vmatpush1.msra.mxu0 0.0
    %131 = vmatprep.subr.mxu0 0.0
    %132 = vmatpush1.msra.mxu0 0.0
    %133 = vmatprep.subr.mxu0 0.0
    %134 = vmatpush1.msra.mxu0 0.0
    %135 = vmatprep.subr.mxu0 0.0
    %136 = vmatpush1.msra.mxu0 0.0
    %137 = vmatprep.subr.mxu0 0.0
    %138 = vmatpush1.msra.mxu0 0.0
    %139 = vmatprep.subr.mxu0 0.0
    %140 = vmatpush1.msra.mxu0 0.0
    %141 = vmatprep.subr.mxu0 0.0
    %142 = vmatpush1.msra.mxu0 0.0
    %143 = vmatprep.subr.mxu0 0.0
    %144 = vmatpush1.msra.mxu0 0.0
    %145 = vmatprep.subr.mxu0 0.0
    %146 = vmatpush1.msra.mxu0 0.0
    %147 = vmatprep.subr.mxu0 0.0
    %148 = vmatpush1.msra.mxu0 0.0
    %149 = vmatprep.subr.mxu0 0.0
    %150 = vmatpush1.msra.mxu0 0.0
    %151 = vmatprep.subr.mxu0 0.0
    %152 = vmatpush1.msra.mxu0 0.0
    %153 = vmatprep.mubr.f32.mxu0 0.0
    %154 = vmatmul.mubr.f32.gmra.mrb[0].mxu0 %v73
    %v155 = vpop.f32.mrb[0].mxu0
    %v156 = vadd.f32 0.0, %v155
    %v157 = vpop.f32.mrb[0].mxu0
    %158 = vdwg.mxu0
    %v159 = vadd.f32 %v24, %v156
    %vm160 = vcmask 44032
    %161 = vst.msk [vmem:[#allocation2] sm:$0xf] %vm160, %v159
    // Predicated region
    $region22: #{tpu_custom_call.1} parent=1 // pred_check
      %p162 = pneg %p18
    $region23: #{tpu_custom_call.1} parent=1 // pred_check_branch
      %164 = sbr.rel (%p162) target = $region25
    $region24: #{tpu_custom_call.1} parent=1 // pred_region
      %v165 = vld [vmem:[#allocation2] sm:$0xf]
      %v166 = vld [vmem:[%s3] sm:$0xf]
      %v167 = vld [vmem:[%s2] sm:$0x1]
      %v169 = vlaneseq
      %v170 = vshrl.u32 %v169, 7
      %v171 = vsub.s32 0, %v170
      %v172 = vrot.slane %v167, %v171
      %v174 = vmul.f32 %v165, %v172
      %s175 = scalar_lea.vmem %s3, 4
      %v176 = vld [vmem:[%s175] sm:$0xf]
      %s177 = scalar_lea.vmem %s2, 1
      %v178 = vld [vmem:[%s177] sm:$0x1]
      %v180 = vlaneseq
      %v181 = vshrl.u32 %v180, 7
      %v182 = vsub.s32 0, %v181
      %v183 = vrot.slane %v178, %v182
      %v185 = vmul.f32 %v165, %v183
      %186 = vxpose.xlu0.b32.start [1/16] %v176, 128
      %187 = vxpose.xlu0.b32.cont [2/16] 0.0, 128
      %188 = vxpose.xlu0.b32.cont [3/16] 0.0, 128
      %189 = vxpose.xlu0.b32.cont [4/16] 0.0, 128
      %190 = vxpose.xlu0.b32.cont [5/16] 0.0, 128
      %191 = vxpose.xlu0.b32.cont [6/16] 0.0, 128
      %192 = vxpose.xlu0.b32.cont [7/16] 0.0, 128
      %193 = vxpose.xlu0.b32.cont [8/16] 0.0, 128
      %194 = vxpose.xlu0.b32.cont [9/16] 0.0, 128
      %195 = vxpose.xlu0.b32.cont [10/16] 0.0, 128
      %196 = vxpose.xlu0.b32.cont [11/16] 0.0, 128
      %197 = vxpose.xlu0.b32.cont [12/16] 0.0, 128
      %198 = vxpose.xlu0.b32.cont [13/16] 0.0, 128
      %199 = vxpose.xlu0.b32.cont [14/16] 0.0, 128
      %200 = vxpose.xlu0.b32.cont [15/16] 0.0, 128
      %201 = vxpose.xlu0.b32.end [16/16] 0.0, 128
      %v202 = vpop.trf.xlu0
      %v203 = vpop.trf.xlu0
      %v204 = vpop.trf.xlu0
      %v205 = vpop.trf.xlu0
      %v206 = vpop.trf.xlu0
      %v207 = vpop.trf.xlu0
      %v208 = vpop.trf.xlu0
      %v209 = vpop.trf.xlu0
      %v210 = vpop.trf.xlu0
      %v211 = vpop.trf.xlu0
      %v212 = vpop.trf.xlu0
      %v213 = vpop.trf.xlu0
      %v214 = vpop.trf.xlu0
      %v215 = vpop.trf.xlu0
      %v216 = vpop.trf.xlu0
      %v217 = vpop.trf.xlu0
      %vm218 = vcmask 31744
      %v220 = vsel %vm218, %v202, 0
      %vm222 = vcmask 1043456
      %v224 = vsel %vm222, %v185, 0
      %226 = vmatprep.subr.mxu0 0.0
      %227 = vmatpush1.msra.mxu0 %v224
      %228 = vmatprep.subr.mxu0 0.0
      %229 = vmatpush1.msra.mxu0 0.0
      %230 = vmatprep.subr.mxu0 0.0
      %231 = vmatpush1.msra.mxu0 0.0
      %232 = vmatprep.subr.mxu0 0.0
      %233 = vmatpush1.msra.mxu0 0.0
      %234 = vmatprep.subr.mxu0 0.0
      %235 = vmatpush1.msra.mxu0 0.0
      %236 = vmatprep.subr.mxu0 0.0
      %237 = vmatpush1.msra.mxu0 0.0
      %238 = vmatprep.subr.mxu0 0.0
      %239 = vmatpush1.msra.mxu0 0.0
      %240 = vmatprep.subr.mxu0 0.0
      %241 = vmatpush1.msra.mxu0 0.0
      %242 = vmatprep.subr.mxu0 0.0
      %243 = vmatpush1.msra.mxu0 0.0
      %244 = vmatprep.subr.mxu0 0.0
      %245 = vmatpush1.msra.mxu0 0.0
      %246 = vmatprep.subr.mxu0 0.0
      %247 = vmatpush1.msra.mxu0 0.0
      %248 = vmatprep.subr.mxu0 0.0
      %249 = vmatpush1.msra.mxu0 0.0
      %250 = vmatprep.subr.mxu0 0.0
      %251 = vmatpush1.msra.mxu0 0.0
      %252 = vmatprep.subr.mxu0 0.0
      %253 = vmatpush1.msra.mxu0 0.0
      %254 = vmatprep.subr.mxu0 0.0
      %255 = vmatpush1.msra.mxu0 0.0
      %256 = vmatprep.subr.mxu0 0.0
      %257 = vmatpush1.msra.mxu0 0.0
      %258 = vmatprep.subr.mxu0 0.0
      %259 = vmatpush1.msra.mxu0 0.0
      %260 = vmatprep.subr.mxu0 0.0
      %261 = vmatpush1.msra.mxu0 0.0
      %262 = vmatprep.subr.mxu0 0.0
      %263 = vmatpush1.msra.mxu0 0.0
      %264 = vmatprep.subr.mxu0 0.0
      %265 = vmatpush1.msra.mxu0 0.0
      %266 = vmatprep.subr.mxu0 0.0
      %267 = vmatpush1.msra.mxu0 0.0
      %268 = vmatprep.subr.mxu0 0.0
      %269 = vmatpush1.msra.mxu0 0.0
      %270 = vmatprep.subr.mxu0 0.0
      %271 = vmatpush1.msra.mxu0 0.0
      %272 = vmatprep.subr.mxu0 0.0
      %273 = vmatpush1.msra.mxu0 0.0
      %274 = vmatprep.subr.mxu0 0.0
      %275 = vmatpush1.msra.mxu0 0.0
      %276 = vmatprep.subr.mxu0 0.0
      %277 = vmatpush1.msra.mxu0 0.0
      %278 = vmatprep.subr.mxu0 0.0
      %279 = vmatpush1.msra.mxu0 0.0
      %280 = vmatprep.subr.mxu0 0.0
      %281 = vmatpush1.msra.mxu0 0.0
      %282 = vmatprep.subr.mxu0 0.0
      %283 = vmatpush1.msra.mxu0 0.0
      %284 = vmatprep.subr.mxu0 0.0
      %285 = vmatpush1.msra.mxu0 0.0
      %286 = vmatprep.subr.mxu0 0.0
      %287 = vmatpush1.msra.mxu0 0.0
      %288 = vmatprep.subr.mxu0 0.0
      %289 = vmatpush1.msra.mxu0 0.0
      %290 = vmatprep.mubr.f32.mxu0 0.0
      %291 = vmatmul.mubr.f32.gmra.mrb[0].mxu0 %v220
      %v292 = vpop.f32.mrb[0].mxu0
      %v293 = vadd.f32 0.0, %v292
      %v294 = vpop.f32.mrb[0].mxu0
      %295 = vdwg.mxu0
      %296 = vxpose.xlu0.b32.start [1/16] %v166, 128
      %297 = vxpose.xlu0.b32.cont [2/16] 0.0, 128
      %298 = vxpose.xlu0.b32.cont [3/16] 0.0, 128
      %299 = vxpose.xlu0.b32.cont [4/16] 0.0, 128
      %300 = vxpose.xlu0.b32.cont [5/16] 0.0, 128
      %301 = vxpose.xlu0.b32.cont [6/16] 0.0, 128
      %302 = vxpose.xlu0.b32.cont [7/16] 0.0, 128
      %303 = vxpose.xlu0.b32.cont [8/16] 0.0, 128
      %304 = vxpose.xlu0.b32.cont [9/16] 0.0, 128
      %305 = vxpose.xlu0.b32.cont [10/16] 0.0, 128
      %306 = vxpose.xlu0.b32.cont [11/16] 0.0, 128
      %307 = vxpose.xlu0.b32.cont [12/16] 0.0, 128
      %308 = vxpose.xlu0.b32.cont [13/16] 0.0, 128
      %309 = vxpose.xlu0.b32.cont [14/16] 0.0, 128
      %310 = vxpose.xlu0.b32.cont [15/16] 0.0, 128
      %311 = vxpose.xlu0.b32.end [16/16] 0.0, 128
      %v312 = vpop.trf.xlu0
      %v313 = vpop.trf.xlu0
      %v314 = vpop.trf.xlu0
      %v315 = vpop.trf.xlu0
      %v316 = vpop.trf.xlu0
      %v317 = vpop.trf.xlu0
      %v318 = vpop.trf.xlu0
      %v319 = vpop.trf.xlu0
      %v320 = vpop.trf.xlu0
      %v321 = vpop.trf.xlu0
      %v322 = vpop.trf.xlu0
      %v323 = vpop.trf.xlu0
      %v324 = vpop.trf.xlu0
      %v325 = vpop.trf.xlu0
      %v326 = vpop.trf.xlu0
      %v327 = vpop.trf.xlu0
      %v329 = vsel %vm218, %v312, 0
      %v332 = vsel %vm222, %v174, 0
      %334 = vmatprep.subr.mxu0 0.0
      %335 = vmatpush1.msra.mxu0 %v332
      %336 = vmatprep.subr.mxu0 0.0
      %337 = vmatpush1.msra.mxu0 0.0
      %338 = vmatprep.subr.mxu0 0.0
      %339 = vmatpush1.msra.mxu0 0.0
      %340 = vmatprep.subr.mxu0 0.0
      %341 = vmatpush1.msra.mxu0 0.0
      %342 = vmatprep.subr.mxu0 0.0
      %343 = vmatpush1.msra.mxu0 0.0
      %344 = vmatprep.subr.mxu0 0.0
      %345 = vmatpush1.msra.mxu0 0.0
      %346 = vmatprep.subr.mxu0 0.0
      %347 = vmatpush1.msra.mxu0 0.0
      %348 = vmatprep.subr.mxu0 0.0
      %349 = vmatpush1.msra.mxu0 0.0
      %350 = vmatprep.subr.mxu0 0.0
      %351 = vmatpush1.msra.mxu0 0.0
      %352 = vmatprep.subr.mxu0 0.0
      %353 = vmatpush1.msra.mxu0 0.0
      %354 = vmatprep.subr.mxu0 0.0
      %355 = vmatpush1.msra.mxu0 0.0
      %356 = vmatprep.subr.mxu0 0.0
      %357 = vmatpush1.msra.mxu0 0.0
      %358 = vmatprep.subr.mxu0 0.0
      %359 = vmatpush1.msra.mxu0 0.0
      %360 = vmatprep.subr.mxu0 0.0
      %361 = vmatpush1.msra.mxu0 0.0
      %362 = vmatprep.subr.mxu0 0.0
      %363 = vmatpush1.msra.mxu0 0.0
      %364 = vmatprep.subr.mxu0 0.0
      %365 = vmatpush1.msra.mxu0 0.0
      %366 = vmatprep.subr.mxu0 0.0
      %367 = vmatpush1.msra.mxu0 0.0
      %368 = vmatprep.subr.mxu0 0.0
      %369 = vmatpush1.msra.mxu0 0.0
      %370 = vmatprep.subr.mxu0 0.0
      %371 = vmatpush1.msra.mxu0 0.0
      %372 = vmatprep.subr.mxu0 0.0
      %373 = vmatpush1.msra.mxu0 0.0
      %374 = vmatprep.subr.mxu0 0.0
      %375 = vmatpush1.msra.mxu0 0.0
      %376 = vmatprep.subr.mxu0 0.0
      %377 = vmatpush1.msra.mxu0 0.0
      %378 = vmatprep.subr.mxu0 0.0
      %379 = vmatpush1.msra.mxu0 0.0
      %380 = vmatprep.subr.mxu0 0.0
      %381 = vmatpush1.msra.mxu0 0.0
      %382 = vmatprep.subr.mxu0 0.0
      %383 = vmatpush1.msra.mxu0 0.0
      %384 = vmatprep.subr.mxu0 0.0
      %385 = vmatpush1.msra.mxu0 0.0
      %386 = vmatprep.subr.mxu0 0.0
      %387 = vmatpush1.msra.mxu0 0.0
      %388 = vmatprep.subr.mxu0 0.0
      %389 = vmatpush1.msra.mxu0 0.0
      %390 = vmatprep.subr.mxu0 0.0
      %391 = vmatpush1.msra.mxu0 0.0
      %392 = vmatprep.subr.mxu0 0.0
      %393 = vmatpush1.msra.mxu0 0.0
      %394 = vmatprep.subr.mxu0 0.0
      %395 = vmatpush1.msra.mxu0 0.0
      %396 = vmatprep.subr.mxu0 0.0
      %397 = vmatpush1.msra.mxu0 0.0
      %398 = vmatprep.mubr.f32.mxu0 0.0
      %399 = vmatmul.mubr.f32.gmra.mrb[0].mxu0 %v329
      %v400 = vpop.f32.mrb[0].mxu0
      %v401 = vadd.f32 %v293, %v400
      %v402 = vpop.f32.mrb[0].mxu0
      %403 = vdwg.mxu0
      %s404 = scalar_lea.vmem %s3, 8
      %v405 = vld [vmem:[%s404] sm:$0xf]
      %s406 = scalar_lea.vmem %s2, 2
      %v407 = vld [vmem:[%s406] sm:$0x1]
      %v409 = vlaneseq
      %v410 = vshrl.u32 %v409, 7
      %v411 = vsub.s32 0, %v410
      %v412 = vrot.slane %v407, %v411
      %v414 = vmul.f32 %v165, %v412
      %415 = vxpose.xlu0.b32.start [1/16] %v405, 128
      %416 = vxpose.xlu0.b32.cont [2/16] 0.0, 128
      %417 = vxpose.xlu0.b32.cont [3/16] 0.0, 128
      %418 = vxpose.xlu0.b32.cont [4/16] 0.0, 128
      %419 = vxpose.xlu0.b32.cont [5/16] 0.0, 128
      %420 = vxpose.xlu0.b32.cont [6/16] 0.0, 128
      %421 = vxpose.xlu0.b32.cont [7/16] 0.0, 128
      %422 = vxpose.xlu0.b32.cont [8/16] 0.0, 128
      %423 = vxpose.xlu0.b32.cont [9/16] 0.0, 128
      %424 = vxpose.xlu0.b32.cont [10/16] 0.0, 128
      %425 = vxpose.xlu0.b32.cont [11/16] 0.0, 128
      %426 = vxpose.xlu0.b32.cont [12/16] 0.0, 128
      %427 = vxpose.xlu0.b32.cont [13/16] 0.0, 128
      %428 = vxpose.xlu0.b32.cont [14/16] 0.0, 128
      %429 = vxpose.xlu0.b32.cont [15/16] 0.0, 128
      %430 = vxpose.xlu0.b32.end [16/16] 0.0, 128
      %v431 = vpop.trf.xlu0
      %v432 = vpop.trf.xlu0
      %v433 = vpop.trf.xlu0
      %v434 = vpop.trf.xlu0
      %v435 = vpop.trf.xlu0
      %v436 = vpop.trf.xlu0
      %v437 = vpop.trf.xlu0
      %v438 = vpop.trf.xlu0
      %v439 = vpop.trf.xlu0
      %v440 = vpop.trf.xlu0
      %v441 = vpop.trf.xlu0
      %v442 = vpop.trf.xlu0
      %v443 = vpop.trf.xlu0
      %v444 = vpop.trf.xlu0
      %v445 = vpop.trf.xlu0
      %v446 = vpop.trf.xlu0
      %v448 = vsel %vm218, %v431, 0
      %v451 = vsel %vm222, %v414, 0
      %453 = vmatprep.subr.mxu0 0.0
      %454 = vmatpush1.msra.mxu0 %v451
      %455 = vmatprep.subr.mxu0 0.0
      %456 = vmatpush1.msra.mxu0 0.0
      %457 = vmatprep.subr.mxu0 0.0
      %458 = vmatpush1.msra.mxu0 0.0
      %459 = vmatprep.subr.mxu0 0.0
      %460 = vmatpush1.msra.mxu0 0.0
      %461 = vmatprep.subr.mxu0 0.0
      %462 = vmatpush1.msra.mxu0 0.0
      %463 = vmatprep.subr.mxu0 0.0
      %464 = vmatpush1.msra.mxu0 0.0
      %465 = vmatprep.subr.mxu0 0.0
      %466 = vmatpush1.msra.mxu0 0.0
      %467 = vmatprep.subr.mxu0 0.0
      %468 = vmatpush1.msra.mxu0 0.0
      %469 = vmatprep.subr.mxu0 0.0
      %470 = vmatpush1.msra.mxu0 0.0
      %471 = vmatprep.subr.mxu0 0.0
      %472 = vmatpush1.msra.mxu0 0.0
      %473 = vmatprep.subr.mxu0 0.0
      %474 = vmatpush1.msra.mxu0 0.0
      %475 = vmatprep.subr.mxu0 0.0
      %476 = vmatpush1.msra.mxu0 0.0
      %477 = vmatprep.subr.mxu0 0.0
      %478 = vmatpush1.msra.mxu0 0.0
      %479 = vmatprep.subr.mxu0 0.0
      %480 = vmatpush1.msra.mxu0 0.0
      %481 = vmatprep.subr.mxu0 0.0
      %482 = vmatpush1.msra.mxu0 0.0
      %483 = vmatprep.subr.mxu0 0.0
      %484 = vmatpush1.msra.mxu0 0.0
      %485 = vmatprep.subr.mxu0 0.0
      %486 = vmatpush1.msra.mxu0 0.0
      %487 = vmatprep.subr.mxu0 0.0
      %488 = vmatpush1.msra.mxu0 0.0
      %489 = vmatprep.subr.mxu0 0.0
      %490 = vmatpush1.msra.mxu0 0.0
      %491 = vmatprep.subr.mxu0 0.0
      %492 = vmatpush1.msra.mxu0 0.0
      %493 = vmatprep.subr.mxu0 0.0
      %494 = vmatpush1.msra.mxu0 0.0
      %495 = vmatprep.subr.mxu0 0.0
      %496 = vmatpush1.msra.mxu0 0.0
      %497 = vmatprep.subr.mxu0 0.0
      %498 = vmatpush1.msra.mxu0 0.0
      %499 = vmatprep.subr.mxu0 0.0
      %500 = vmatpush1.msra.mxu0 0.0
      %501 = vmatprep.subr.mxu0 0.0
      %502 = vmatpush1.msra.mxu0 0.0
      %503 = vmatprep.subr.mxu0 0.0
      %504 = vmatpush1.msra.mxu0 0.0
      %505 = vmatprep.subr.mxu0 0.0
      %506 = vmatpush1.msra.mxu0 0.0
      %507 = vmatprep.subr.mxu0 0.0
      %508 = vmatpush1.msra.mxu0 0.0
      %509 = vmatprep.subr.mxu0 0.0
      %510 = vmatpush1.msra.mxu0 0.0
      %511 = vmatprep.subr.mxu0 0.0
      %512 = vmatpush1.msra.mxu0 0.0
      %513 = vmatprep.subr.mxu0 0.0
      %514 = vmatpush1.msra.mxu0 0.0
      %515 = vmatprep.subr.mxu0 0.0
      %516 = vmatpush1.msra.mxu0 0.0
      %517 = vmatprep.mubr.f32.mxu0 0.0
      %518 = vmatmul.mubr.f32.gmra.mrb[0].mxu0 %v448
      %v519 = vpop.f32.mrb[0].mxu0
      %v520 = vadd.f32 0.0, %v519
      %v521 = vpop.f32.mrb[0].mxu0
      %522 = vdwg.mxu0
      %v523 = vadd.f32 %v401, %v520
      %s524 = scalar_lea.vmem %s3, 12
      %v525 = vld [vmem:[%s524] sm:$0xf]
      %s526 = scalar_lea.vmem %s2, 3
      %v527 = vld [vmem:[%s526] sm:$0x1]
      %v529 = vlaneseq
      %v530 = vshrl.u32 %v529, 7
      %v531 = vsub.s32 0, %v530
      %v532 = vrot.slane %v527, %v531
      %v534 = vmul.f32 %v165, %v532
      %535 = vxpose.xlu0.b32.start [1/16] %v525, 128
      %536 = vxpose.xlu0.b32.cont [2/16] 0.0, 128
      %537 = vxpose.xlu0.b32.cont [3/16] 0.0, 128
      %538 = vxpose.xlu0.b32.cont [4/16] 0.0, 128
      %539 = vxpose.xlu0.b32.cont [5/16] 0.0, 128
      %540 = vxpose.xlu0.b32.cont [6/16] 0.0, 128
      %541 = vxpose.xlu0.b32.cont [7/16] 0.0, 128
      %542 = vxpose.xlu0.b32.cont [8/16] 0.0, 128
      %543 = vxpose.xlu0.b32.cont [9/16] 0.0, 128
      %544 = vxpose.xlu0.b32.cont [10/16] 0.0, 128
      %545 = vxpose.xlu0.b32.cont [11/16] 0.0, 128
      %546 = vxpose.xlu0.b32.cont [12/16] 0.0, 128
      %547 = vxpose.xlu0.b32.cont [13/16] 0.0, 128
      %548 = vxpose.xlu0.b32.cont [14/16] 0.0, 128
      %549 = vxpose.xlu0.b32.cont [15/16] 0.0, 128
      %550 = vxpose.xlu0.b32.end [16/16] 0.0, 128
      %v551 = vpop.trf.xlu0
      %v552 = vpop.trf.xlu0
      %v553 = vpop.trf.xlu0
      %v554 = vpop.trf.xlu0
      %v555 = vpop.trf.xlu0
      %v556 = vpop.trf.xlu0
      %v557 = vpop.trf.xlu0
      %v558 = vpop.trf.xlu0
      %v559 = vpop.trf.xlu0
      %v560 = vpop.trf.xlu0
      %v561 = vpop.trf.xlu0
      %v562 = vpop.trf.xlu0
      %v563 = vpop.trf.xlu0
      %v564 = vpop.trf.xlu0
      %v565 = vpop.trf.xlu0
      %v566 = vpop.trf.xlu0
      %v568 = vsel %vm218, %v551, 0
      %v571 = vsel %vm222, %v534, 0
      %573 = vmatprep.subr.mxu0 0.0
      %574 = vmatpush1.msra.mxu0 %v571
      %575 = vmatprep.subr.mxu0 0.0
      %576 = vmatpush1.msra.mxu0 0.0
      %577 = vmatprep.subr.mxu0 0.0
      %578 = vmatpush1.msra.mxu0 0.0
      %579 = vmatprep.subr.mxu0 0.0
      %580 = vmatpush1.msra.mxu0 0.0
      %581 = vmatprep.subr.mxu0 0.0
      %582 = vmatpush1.msra.mxu0 0.0
      %583 = vmatprep.subr.mxu0 0.0
      %584 = vmatpush1.msra.mxu0 0.0
      %585 = vmatprep.subr.mxu0 0.0
      %586 = vmatpush1.msra.mxu0 0.0
      %587 = vmatprep.subr.mxu0 0.0
      %588 = vmatpush1.msra.mxu0 0.0
      %589 = vmatprep.subr.mxu0 0.0
      %590 = vmatpush1.msra.mxu0 0.0
      %591 = vmatprep.subr.mxu0 0.0
      %592 = vmatpush1.msra.mxu0 0.0
      %593 = vmatprep.subr.mxu0 0.0
      %594 = vmatpush1.msra.mxu0 0.0
      %595 = vmatprep.subr.mxu0 0.0
      %596 = vmatpush1.msra.mxu0 0.0
      %597 = vmatprep.subr.mxu0 0.0
      %598 = vmatpush1.msra.mxu0 0.0
      %599 = vmatprep.subr.mxu0 0.0
      %600 = vmatpush1.msra.mxu0 0.0
      %601 = vmatprep.subr.mxu0 0.0
      %602 = vmatpush1.msra.mxu0 0.0
      %603 = vmatprep.subr.mxu0 0.0
      %604 = vmatpush1.msra.mxu0 0.0
      %605 = vmatprep.subr.mxu0 0.0
      %606 = vmatpush1.msra.mxu0 0.0
      %607 = vmatprep.subr.mxu0 0.0
      %608 = vmatpush1.msra.mxu0 0.0
      %609 = vmatprep.subr.mxu0 0.0
      %610 = vmatpush1.msra.mxu0 0.0
      %611 = vmatprep.subr.mxu0 0.0
      %612 = vmatpush1.msra.mxu0 0.0
      %613 = vmatprep.subr.mxu0 0.0
      %614 = vmatpush1.msra.mxu0 0.0
      %615 = vmatprep.subr.mxu0 0.0
      %616 = vmatpush1.msra.mxu0 0.0
      %617 = vmatprep.subr.mxu0 0.0
      %618 = vmatpush1.msra.mxu0 0.0
      %619 = vmatprep.subr.mxu0 0.0
      %620 = vmatpush1.msra.mxu0 0.0
      %621 = vmatprep.subr.mxu0 0.0
      %622 = vmatpush1.msra.mxu0 0.0
      %623 = vmatprep.subr.mxu0 0.0
      %624 = vmatpush1.msra.mxu0 0.0
      %625 = vmatprep.subr.mxu0 0.0
      %626 = vmatpush1.msra.mxu0 0.0
      %627 = vmatprep.subr.mxu0 0.0
      %628 = vmatpush1.msra.mxu0 0.0
      %629 = vmatprep.subr.mxu0 0.0
      %630 = vmatpush1.msra.mxu0 0.0
      %631 = vmatprep.subr.mxu0 0.0
      %632 = vmatpush1.msra.mxu0 0.0
      %633 = vmatprep.subr.mxu0 0.0
      %634 = vmatpush1.msra.mxu0 0.0
      %635 = vmatprep.subr.mxu0 0.0
      %636 = vmatpush1.msra.mxu0 0.0
      %637 = vmatprep.mubr.f32.mxu0 0.0
      %638 = vmatmul.mubr.f32.gmra.mrb[0].mxu0 %v568
      %v639 = vpop.f32.mrb[0].mxu0
      %v640 = vadd.f32 0.0, %v639
      %v641 = vpop.f32.mrb[0].mxu0
      %642 = vdwg.mxu0
      %v643 = vadd.f32 %v523, %v640
      %v644 = vmul.f32 %v643, 2.0
      %vm645 = vcmask 48128
      %646 = vst.msk [vmem:[#allocation3] sm:$0xff] %vm645, %v644
    $region25: #{tpu_custom_call.1} parent=1 // pred_fallthru
      _
    // Predicated region
    $region26: #{tpu_custom_call.1} parent=1 // pred_check
      _
    $region27: #{tpu_custom_call.1} parent=1 // pred_check_branch
      %648 = sbr.rel (0) target = $region29
    $region28: #{tpu_custom_call.1} parent=1 // pred_region
      %s650 = ssub.s32 128, 128
      %651 = vsyncadd [#allocation4], %s650
      %s653 = sshll.u32 [#allocation3], 4
      %s654 = int_to_ptr.vmem [resolvable:$true] %s653
      %656 = dma.vmem_to_hbm [thread:$0]  %s654, 128, %s4, [#allocation4]
    $region29: #{tpu_custom_call.1} parent=1 // pred_fallthru
      _
    // Predicated region
    $region30: #{tpu_custom_call.1} parent=1 // pred_check
      _
    $region31: #{tpu_custom_call.1} parent=1 // pred_check_branch
      %658 = sbr.rel (0) target = $region33
    $region32: #{tpu_custom_call.1} parent=1 // pred_region
      %659 = dma.done [#allocation4], 128
    $region33: #{tpu_custom_call.1} parent=1 // pred_fallthru
      _
    %660 = vsyncpa [#allocation4], 1

</llo_original>
